<compile_context>
chip_gen: v7x
topology: tpu7x:2x2x1
jax: 0.10.0
libtpu: 0.0.40
codegen_flags: <defaults>
</compile_context>

<pallas_src>
import jax
import jax.numpy as jnp
from jax.experimental import pallas as pl
from jax.experimental.pallas import tpu as pltpu


def linear_fa_kernel(s_ref, w_ref, q_ref):
    """Accumulate one K-tile of Q = state_feat @ W directly into the f32 output."""
    k = pl.program_id(2)

    @pl.when(k == 0)
    def _init():
        q_ref[...] = jnp.zeros_like(q_ref)

    q_ref[...] += jnp.dot(
        s_ref[...], w_ref[...], preferred_element_type=jnp.float32
    )


def _round_up(x, m):
    return ((x + m - 1) // m) * m


def function_approximation_policy(
    state_feat, model_weights, *, tm_cap=256, tn_cap=256, tk_cap=512
):
    """Q-values = state_feat @ model_weights via a Pallas TPU kernel.

    state_feat:    [B, F] float
    model_weights: [F, A] float
    returns:       [B, A] float32
    """
    B, F = state_feat.shape
    F2, A = model_weights.shape
    assert F == F2, "feature dims must match"

    # bf16 is the native MXU input dtype; accumulation stays f32 in-kernel.
    sf = state_feat if state_feat.dtype == jnp.bfloat16 else state_feat.astype(jnp.bfloat16)
    w = model_weights if model_weights.dtype == jnp.bfloat16 else model_weights.astype(jnp.bfloat16)

    # Tile selection: collapse small problems to one grid point; for larger
    # shapes caps keep 2*(tm*tk + tk*tn)*2B + tm*tn*4B well under ~1.5 MiB.
    tm = min(tm_cap, _round_up(B, 8))
    tn = min(tn_cap, _round_up(A, 128))
    tk = min(tk_cap, _round_up(F, 128))

    # Zero-pad to tile multiples (zeros contribute nothing to the dot); keeps
    # the output lane-dense (multiple of 128) and satisfies (8,128) blocking.
    Bp, Ap, Fp = _round_up(B, tm), _round_up(A, tn), _round_up(F, tk)
    if (Bp, Fp) != (B, F):
        sf = jnp.pad(sf, ((0, Bp - B), (0, Fp - F)))
    if (Fp, Ap) != (F, A):
        w = jnp.pad(w, ((0, Fp - F), (0, Ap - A)))

    grid = (Bp // tm, Ap // tn, Fp // tk)  # K last (reduction axis)

    cost = pl.CostEstimate(
        flops=2 * Bp * Ap * Fp,
        transcendentals=0,
        bytes_accessed=(Bp * Fp + Fp * Ap) * 2 + Bp * Ap * 4,
    )

    q = pl.pallas_call(
        linear_fa_kernel,
        out_shape=jax.ShapeDtypeStruct((Bp, Ap), jnp.float32),
        grid_spec=pltpu.PrefetchScalarGridSpec(
            num_scalar_prefetch=0,
            grid=grid,
            in_specs=[
                pl.BlockSpec((tm, tk), lambda i, j, k: (i, k)),  # state-feat tile
                pl.BlockSpec((tk, tn), lambda i, j, k: (k, j)),  # weight tile
            ],
            # Output block is resident across the K axis -> direct accumulation.
            out_specs=pl.BlockSpec((tm, tn), lambda i, j, k: (i, j)),
        ),
        compiler_params=pltpu.CompilerParams(
            dimension_semantics=("parallel", "parallel", "arbitrary"),
        ),
        cost_estimate=cost,
    )(sf, w)

    if (Bp, Ap) != (B, A):
        q = q[:B, :A]
    return q


if __name__ == "__main__":
    # Small, deterministic synthetic shapes: batch=8, features=256, actions=128.
    B, F, A = 8, 256, 128

    key = jax.random.PRNGKey(0)
    k_feat, k_w = jax.random.split(key)

    state_feat = jax.random.normal(k_feat, (B, F), dtype=jnp.float32)
    # Deterministic synthetic "model" (linear FA weight table), not a checkpoint.
    model_weights = (0.02 * jax.random.normal(k_w, (F, A))).astype(jnp.float32)

    q = function_approximation_policy(state_feat, model_weights)
    q = jax.block_until_ready(q)

    # Correctness check against plain-JAX f32 reference (bf16 inputs in-kernel,
    # f32 accumulation -> loose-ish tolerance).
    q_ref = state_feat @ model_weights
    assert q.shape == (B, A)
    assert jnp.allclose(q, q_ref, atol=2e-2, rtol=2e-2), (
        float(jnp.max(jnp.abs(q - q_ref)))
    )

    print("KERNEL_OK")
</pallas_src>

<mosaic_0001>
module attributes {stable_mosaic.version = 11 : i64} {
  func.func @linear_fa_kernel(%arg0: i32, %arg1: i32, %arg2: i32, %arg3: memref<8x256xbf16, #tpu.memory_space<vmem>>, %arg4: memref<256x128xbf16, #tpu.memory_space<vmem>>, %arg5: memref<8x128xf32, #tpu.memory_space<vmem>>) attributes {dimension_semantics = [#tpu.dimension_semantics<parallel>, #tpu.dimension_semantics<parallel>, #tpu.dimension_semantics<arbitrary>], iteration_bounds = array<i64: 1, 1, 1>, scalar_prefetch = 0 : i64, scratch_operands = 0 : i64, tpu.core_type = #tpu.core_type<tc>, window_params = [{transform_indices = @transform_0, window_bounds = array<i64: 8, 256>}, {transform_indices = @transform_1, window_bounds = array<i64: 256, 128>}, {transform_indices = @transform_2, window_bounds = array<i64: 8, 128>}]} {
    %c0_i32 = arith.constant 0 : i32
    %0 = arith.cmpi eq, %arg2, %c0_i32 : i32
    %1 = arith.extui %0 : i1 to i32
    %c0_i32_0 = arith.constant 0 : i32
    %2 = arith.cmpi ne, %1, %c0_i32_0 : i32
    scf.if %2 {
      %cst_8 = arith.constant 0.000000e+00 : f32
      %9 = vector.broadcast %cst_8 : f32 to vector<8x128xf32>
      %c0_9 = arith.constant 0 : index
      %c0_10 = arith.constant 0 : index
      %10 = vector.load %arg5[%c0_9, %c0_10] : memref<8x128xf32, #tpu.memory_space<vmem>>, vector<8x128xf32>
      tpu.vector_store %arg5[%c0_9, %c0_10], %9 {strides = array<i32>} : memref<8x128xf32, #tpu.memory_space<vmem>>, vector<8x128xf32>,
    } else {
    }
    %c0 = arith.constant 0 : index
    %c0_1 = arith.constant 0 : index
    %3 = vector.load %arg5[%c0, %c0_1] : memref<8x128xf32, #tpu.memory_space<vmem>>, vector<8x128xf32>
    %c0_2 = arith.constant 0 : index
    %c0_3 = arith.constant 0 : index
    %4 = vector.load %arg3[%c0_2, %c0_3] : memref<8x256xbf16, #tpu.memory_space<vmem>>, vector<8x256xbf16>
    %c0_4 = arith.constant 0 : index
    %c0_5 = arith.constant 0 : index
    %5 = vector.load %arg4[%c0_4, %c0_5] : memref<256x128xbf16, #tpu.memory_space<vmem>>, vector<256x128xbf16>
    %cst = arith.constant dense<0.000000e+00> : vector<8x128xf32>
    %6 = tpu.matmul %4, %5, %cst {dimension_numbers = #tpu.dot_dimension_numbers<[1], [0], [0], [1], [0, 0, 1, 1], [], []>} : vector<8x256xbf16>, vector<256x128xbf16>, vector<8x128xf32> -> vector<8x128xf32>
    %7 = arith.addf %3, %6 : vector<8x128xf32>
    %c0_6 = arith.constant 0 : index
    %c0_7 = arith.constant 0 : index
    %8 = vector.load %arg5[%c0_6, %c0_7] : memref<8x128xf32, #tpu.memory_space<vmem>>, vector<8x128xf32>
    tpu.vector_store %arg5[%c0_6, %c0_7], %7 {strides = array<i32>} : memref<8x128xf32, #tpu.memory_space<vmem>>, vector<8x128xf32>,
    return
  }
  func.func @transform_0(%arg0: i32, %arg1: i32, %arg2: i32) -> (i32, i32) {
    %c0_i32 = arith.constant 0 : i32
    return %arg0, %arg2 : i32, i32
  }
  func.func @transform_1(%arg0: i32, %arg1: i32, %arg2: i32) -> (i32, i32) {
    %c0_i32 = arith.constant 0 : i32
    return %arg2, %arg1 : i32, i32
  }
  func.func @transform_2(%arg0: i32, %arg1: i32, %arg2: i32) -> (i32, i32) {
    %c0_i32 = arith.constant 0 : i32
    return %arg0, %arg1 : i32, i32
  }
}

</mosaic_0001>

<llo_original>
// kernel: tpu_custom_call.1
$region0: #{tpu_custom_call.1}
  #allocation0 [shape = 'u32[]', space=smem, size = 0x4, offset = 0x4, fixed_abs, tag = 'smem constant byte address 0x4 - core index']
  #allocation1 [shape = 'u32[144,128]{1,0:T(1,128)}', space=vmem, size = 0x12000, scoped, tag = 'internal scratch']
  %s0 = inlined_call_operand.hbm [shape: bf16[8,256], index: 0, kind: input, shape index: {}]
  %s1 = inlined_call_operand.hbm [shape: bf16[256,128], index: 1, kind: input, shape index: {}]
  %s2 = inlined_call_operand.hbm [shape: f32[8,128], index: 2, kind: output, shape index: {}]
  %s3 = sld [smem:[#allocation0]]
  $region30: #{tpu_custom_call.1} parent=0
    _
  %s5 = ssub.s32 1, %s3
  %s6 = scalar_select 0, %s5, %s3
  $region1: #{tpu_custom_call.1} parent=0
    #allocation2 [shape = 'u8[4096]{0}', space=vmem, size = 0x1000, scoped, tag = 'input window, operand 0, single buffered']
    #allocation3 [shape = 's32[1]{0}', space=sflag, size = 0x4, scoped, tag = 'scoped memory for tpu_custom_call.1']
    #allocation4 [shape = 's32[1]{0}', space=sflag, size = 0x4, scoped, tag = 'scoped memory for tpu_custom_call.1']
    #allocation5 [shape = 'u8[65536]{0}', space=vmem, size = 0x10000, scoped, tag = 'input window, operand 1, single buffered']
    #allocation6 [shape = 's32[1]{0}', space=sflag, size = 0x4, scoped, tag = 'scoped memory for tpu_custom_call.1']
    #allocation7 [shape = 'u8[4096]{0}', space=vmem, size = 0x1000, scoped, tag = 'output window, operand 0, single buffered']
    %7 = vsyncpa [#allocation3], 0
    %8 = vsyncpa [#allocation6], 0
    %9 = vsyncpa [#allocation4], 0
    // Predicated region
    $region2: #{tpu_custom_call.1} parent=1 // pred_check
      _
    $region3: #{tpu_custom_call.1} parent=1 // pred_check_branch
      %11 = sbr.rel (0) target = $region5
    $region4: #{tpu_custom_call.1} parent=1 // pred_region
      %s13 = ssub.s32 128, 128
      %14 = vsyncadd [#allocation3], %s13
      %s16 = sshll.u32 [#allocation2], 4
      %s17 = int_to_ptr.vmem [resolvable:$true] %s16
      %19 = dma.hbm_to_vmem [thread:$0]  %s0, 128, %s17, [#allocation3]
    $region5: #{tpu_custom_call.1} parent=1 // pred_fallthru
      _
    // Predicated region
    $region6: #{tpu_custom_call.1} parent=1 // pred_check
      _
    $region7: #{tpu_custom_call.1} parent=1 // pred_check_branch
      %21 = sbr.rel (0) target = $region9
    $region8: #{tpu_custom_call.1} parent=1 // pred_region
      %s23 = ssub.s32 2048, 2048
      %24 = vsyncadd [#allocation6], %s23
      %s25 = sshll.u32 [#allocation5], 4
      %s26 = int_to_ptr.vmem [resolvable:$true] %s25
      %31 = dma.hbm_to_vmem [thread:$0]  %s1, 2048, %s26, [#allocation6], 64, 64, 4
    $region9: #{tpu_custom_call.1} parent=1 // pred_fallthru
      _
    // Predicated region
    $region10: #{tpu_custom_call.1} parent=1 // pred_check
      _
    $region11: #{tpu_custom_call.1} parent=1 // pred_check_branch
      %33 = sbr.rel (0) target = $region13
    $region12: #{tpu_custom_call.1} parent=1 // pred_region
      %34 = dma.done [#allocation3], 128
    $region13: #{tpu_custom_call.1} parent=1 // pred_fallthru
      _
    // Predicated region
    $region14: #{tpu_custom_call.1} parent=1 // pred_check
      _
    $region15: #{tpu_custom_call.1} parent=1 // pred_check_branch
      %36 = sbr.rel (0) target = $region17
    $region16: #{tpu_custom_call.1} parent=1 // pred_region
      %37 = dma.done [#allocation6], 2048
    $region17: #{tpu_custom_call.1} parent=1 // pred_fallthru
      _
    %p39 = scmp.eq.s32.totalorder 0, 0
    // Predicated region
    $region18: #{tpu_custom_call.1} parent=1 // pred_check
      %p40 = pneg %p39
    $region19: #{tpu_custom_call.1} parent=1 // pred_check_branch
      %42 = sbr.rel (%p40) target = $region21
    $region20: #{tpu_custom_call.1} parent=1 // pred_region
      %43 = vst [vmem:[#allocation7] sm:$0xff] 0.0
    $region21: #{tpu_custom_call.1} parent=1 // pred_fallthru
      _
    %v44 = vld [vmem:[#allocation7] sm:$0xff]
    %v45 = vld [vmem:[#allocation2] sm:$0xff]
    %v46 = vld [vmem:[#allocation5] sm:$0xf]
    %v47 = vld [vmem:[#allocation5 + $0x4] sm:$0xf]
    %v48 = vld [vmem:[#allocation5 + $0x8] sm:$0xf]
    %v49 = vld [vmem:[#allocation5 + $0xc] sm:$0xf]
    %v50 = vld [vmem:[#allocation5 + $0x10] sm:$0xf]
    %v51 = vld [vmem:[#allocation5 + $0x14] sm:$0xf]
    %v52 = vld [vmem:[#allocation5 + $0x18] sm:$0xf]
    %v53 = vld [vmem:[#allocation5 + $0x1c] sm:$0xf]
    %v54 = vld [vmem:[#allocation5 + $0x20] sm:$0xf]
    %v55 = vld [vmem:[#allocation5 + $0x24] sm:$0xf]
    %v56 = vld [vmem:[#allocation5 + $0x28] sm:$0xf]
    %v57 = vld [vmem:[#allocation5 + $0x2c] sm:$0xf]
    %v58 = vld [vmem:[#allocation5 + $0x30] sm:$0xf]
    %v59 = vld [vmem:[#allocation5 + $0x34] sm:$0xf]
    %v60 = vld [vmem:[#allocation5 + $0x38] sm:$0xf]
    %v61 = vld [vmem:[#allocation5 + $0x3c] sm:$0xf]
    %v62 = vld [vmem:[#allocation5 + $0x40] sm:$0xf]
    %v63 = vld [vmem:[#allocation5 + $0x44] sm:$0xf]
    %v64 = vld [vmem:[#allocation5 + $0x48] sm:$0xf]
    %v65 = vld [vmem:[#allocation5 + $0x4c] sm:$0xf]
    %v66 = vld [vmem:[#allocation5 + $0x50] sm:$0xf]
    %v67 = vld [vmem:[#allocation5 + $0x54] sm:$0xf]
    %v68 = vld [vmem:[#allocation5 + $0x58] sm:$0xf]
    %v69 = vld [vmem:[#allocation5 + $0x5c] sm:$0xf]
    %v70 = vld [vmem:[#allocation5 + $0x60] sm:$0xf]
    %v71 = vld [vmem:[#allocation5 + $0x64] sm:$0xf]
    %v72 = vld [vmem:[#allocation5 + $0x68] sm:$0xf]
    %v73 = vld [vmem:[#allocation5 + $0x6c] sm:$0xf]
    %v74 = vld [vmem:[#allocation5 + $0x70] sm:$0xf]
    %v75 = vld [vmem:[#allocation5 + $0x74] sm:$0xf]
    %v76 = vld [vmem:[#allocation5 + $0x78] sm:$0xf]
    %v77 = vld [vmem:[#allocation5 + $0x7c] sm:$0xf]
    %v79 = vunpack.c.l.b16 %v45
    %v80 = vunpack.c.h.b16 %v45
    %v81 = vpack.c.b16 %v79, %v79
    %v82 = vpack.c.b16 %v80, %v80
    %v117 = vunpack.c.l.b16 %v46
    %v118 = vunpack.c.l.b16 %v47
    %v119 = vunpack.c.l.b16 %v48
    %v120 = vunpack.c.l.b16 %v49
    %v121 = vunpack.c.l.b16 %v50
    %v122 = vunpack.c.l.b16 %v51
    %v123 = vunpack.c.l.b16 %v52
    %v124 = vunpack.c.l.b16 %v53
    %v125 = vunpack.c.l.b16 %v54
    %v126 = vunpack.c.l.b16 %v55
    %v127 = vunpack.c.l.b16 %v56
    %v128 = vunpack.c.l.b16 %v57
    %v129 = vunpack.c.l.b16 %v58
    %v130 = vunpack.c.l.b16 %v59
    %v131 = vunpack.c.l.b16 %v60
    %v132 = vunpack.c.l.b16 %v61
    %v133 = vunpack.c.l.b16 %v62
    %v134 = vunpack.c.l.b16 %v63
    %v135 = vunpack.c.l.b16 %v64
    %v136 = vunpack.c.l.b16 %v65
    %v137 = vunpack.c.l.b16 %v66
    %v138 = vunpack.c.l.b16 %v67
    %v139 = vunpack.c.l.b16 %v68
    %v140 = vunpack.c.l.b16 %v69
    %v141 = vunpack.c.l.b16 %v70
    %v142 = vunpack.c.l.b16 %v71
    %v143 = vunpack.c.l.b16 %v72
    %v144 = vunpack.c.l.b16 %v73
    %v145 = vunpack.c.l.b16 %v74
    %v146 = vunpack.c.l.b16 %v75
    %v147 = vunpack.c.l.b16 %v76
    %v148 = vunpack.c.l.b16 %v77
    %v149 = vpack.c.b16 %v118, %v117
    %v150 = vpack.c.b16 %v120, %v119
    %v151 = vpack.c.b16 %v122, %v121
    %v152 = vpack.c.b16 %v124, %v123
    %v153 = vpack.c.b16 %v126, %v125
    %v154 = vpack.c.b16 %v128, %v127
    %v155 = vpack.c.b16 %v130, %v129
    %v156 = vpack.c.b16 %v132, %v131
    %v157 = vpack.c.b16 %v134, %v133
    %v158 = vpack.c.b16 %v136, %v135
    %v159 = vpack.c.b16 %v138, %v137
    %v160 = vpack.c.b16 %v140, %v139
    %v161 = vpack.c.b16 %v142, %v141
    %v162 = vpack.c.b16 %v144, %v143
    %v163 = vpack.c.b16 %v146, %v145
    %v164 = vpack.c.b16 %v148, %v147
    %181 = vmatprep.subr.bf16.mxu0 0
    %182 = vmatpush1.bf16.msra.mxu0 %v149
    %183 = vmatprep.subr.bf16.mxu0 0
    %184 = vmatpush1.bf16.msra.mxu0 %v150
    %185 = vmatprep.subr.bf16.mxu0 0
    %186 = vmatpush1.bf16.msra.mxu0 %v151
    %187 = vmatprep.subr.bf16.mxu0 0
    %188 = vmatpush1.bf16.msra.mxu0 %v152
    %189 = vmatprep.subr.bf16.mxu0 0
    %190 = vmatpush1.bf16.msra.mxu0 %v153
    %191 = vmatprep.subr.bf16.mxu0 0
    %192 = vmatpush1.bf16.msra.mxu0 %v154
    %193 = vmatprep.subr.bf16.mxu0 0
    %194 = vmatpush1.bf16.msra.mxu0 %v155
    %195 = vmatprep.subr.bf16.mxu0 0
    %196 = vmatpush1.bf16.msra.mxu0 %v156
    %197 = vmatprep.subr.bf16.mxu0 0
    %198 = vmatpush1.bf16.msra.mxu0 %v157
    %199 = vmatprep.subr.bf16.mxu0 0
    %200 = vmatpush1.bf16.msra.mxu0 %v158
    %201 = vmatprep.subr.bf16.mxu0 0
    %202 = vmatpush1.bf16.msra.mxu0 %v159
    %203 = vmatprep.subr.bf16.mxu0 0
    %204 = vmatpush1.bf16.msra.mxu0 %v160
    %205 = vmatprep.subr.bf16.mxu0 0
    %206 = vmatpush1.bf16.msra.mxu0 %v161
    %207 = vmatprep.subr.bf16.mxu0 0
    %208 = vmatpush1.bf16.msra.mxu0 %v162
    %209 = vmatprep.subr.bf16.mxu0 0
    %210 = vmatpush1.bf16.msra.mxu0 %v163
    %211 = vmatprep.subr.bf16.mxu0 0
    %212 = vmatpush1.bf16.msra.mxu0 %v164
    %213 = vmatprep.mubr.bf16.mxu0 %v82
    %214 = vmatmul.mubr.bf16.gmra.mrb[0].mxu0 %v81
    %v215 = vpop.f32.mrb[0].mxu0
    %v216 = vadd.f32 0.0, %v215
    %v217 = vpop.f32.mrb[0].mxu0
    %v218 = vpop.f32.mrb[0].mxu0
    %v219 = vpop.f32.mrb[0].mxu0
    %220 = vdwg.mxu0
    %v221 = vadd.f32 %v44, %v216
    %222 = vst [vmem:[#allocation7] sm:$0xff] %v221
    // Predicated region
    $region22: #{tpu_custom_call.1} parent=1 // pred_check
      _
    $region23: #{tpu_custom_call.1} parent=1 // pred_check_branch
      %224 = sbr.rel (0) target = $region25
    $region24: #{tpu_custom_call.1} parent=1 // pred_region
      %s226 = ssub.s32 128, 128
      %227 = vsyncadd [#allocation4], %s226
      %s229 = sshll.u32 [#allocation7], 4
      %s230 = int_to_ptr.vmem [resolvable:$true] %s229
      %232 = dma.vmem_to_hbm [thread:$0]  %s230, 128, %s2, [#allocation4]
    $region25: #{tpu_custom_call.1} parent=1 // pred_fallthru
      _
    // Predicated region
    $region26: #{tpu_custom_call.1} parent=1 // pred_check
      _
    $region27: #{tpu_custom_call.1} parent=1 // pred_check_branch
      %234 = sbr.rel (0) target = $region29
    $region28: #{tpu_custom_call.1} parent=1 // pred_region
      %235 = dma.done [#allocation4], 128
    $region29: #{tpu_custom_call.1} parent=1 // pred_fallthru
      _
    %236 = vsyncpa [#allocation3], 1
    %237 = vsyncpa [#allocation6], 1
    %238 = vsyncpa [#allocation4], 1

</llo_original>
